<compile_context>
chip_gen: v7x
topology: tpu7x:2x2x1
jax: 0.10.0
libtpu: 0.0.40
codegen_flags: <defaults>
</compile_context>

<pallas_src>
import jax
import jax.numpy as jnp
from jax.experimental import pallas as pl
from jax.experimental.pallas import tpu as pltpu


def he_init_scale(factor, gain=2 ** 0.5):
    return gain * factor ** (-0.5)


def _choose_tile(dim, align, max_tile):
    """Largest divisor of `dim` that is a multiple of `align` and <= max_tile.

    Falls back to the full dim (no tiling along this axis) when no such
    divisor exists -- full-extent blocks are always legal on TPU.
    """
    if dim <= max_tile:
        return dim
    t = (max_tile // align) * align
    while t >= align:
        if dim % t == 0:
            return t
        t -= align
    return dim


def style_mod_kernel(scale_ref, shift_ref, img_ref, out_ref):
    # scale_ref: (1, C_tile, 1)        -- (style_scale + 1), f32
    # shift_ref: (1, C_tile, 1)        -- style_shift, f32
    # img_ref:   (1, C_tile, HW_tile)
    # out_ref:   (1, C_tile, HW_tile)
    x = img_ref[...].astype(jnp.float32)          # keep math in f32 (bf16-safe)
    out_ref[...] = (x * scale_ref[...] + shift_ref[...]).astype(out_ref.dtype)


def style_mod(img, latent, weight, bias):
    """img: (B, C, H, W); latent: (B, L); weight: (2C, L); bias: (2C,)."""
    B, C, H, W = img.shape
    HW = H * W
    itemsize = jnp.dtype(img.dtype).itemsize

    # --- affine hoisted out of the kernel: one batched XLA gemm -------------
    style = (latent @ weight.T + bias).astype(jnp.float32)        # (B, 2C)
    scale_p1 = (style[:, :C] + 1.0).reshape(B, C, 1)              # style[:,0] + 1
    shift = style[:, C:].reshape(B, C, 1)                         # style[:,1]

    # --- lane-dense layout: (B, C, H*W) -------------------------------------
    img_flat = img.reshape(B, C, HW)

    # --- VMEM-aware tiling ---------------------------------------------------
    # ~2 MiB per tile buffer -> in+out double-buffered ~8 MiB: fits the default
    # scoped VMEM on every generation (v5e 16 MiB, v6e 32 MiB, v7x 32/64 MiB)
    # while staying wide enough (>=512 lanes) to hit the HBM roofline.
    tile_budget_bytes = 2 * 1024 * 1024
    c_tile = _choose_tile(C, 8, 128)
    hw_target = max(128, tile_budget_bytes // max(1, c_tile * itemsize))
    hw_tile = _choose_tile(HW, 128, hw_target)

    grid = (B, C // c_tile, HW // hw_tile)

    out_flat = pl.pallas_call(
        style_mod_kernel,
        out_shape=jax.ShapeDtypeStruct((B, C, HW), img.dtype),
        grid_spec=pltpu.PrefetchScalarGridSpec(
            num_scalar_prefetch=0,
            grid=grid,
            in_specs=[
                pl.BlockSpec((1, c_tile, 1), lambda b, ci, si: (b, ci, 0)),
                pl.BlockSpec((1, c_tile, 1), lambda b, ci, si: (b, ci, 0)),
                pl.BlockSpec((1, c_tile, hw_tile), lambda b, ci, si: (b, ci, si)),
            ],
            out_specs=pl.BlockSpec((1, c_tile, hw_tile),
                                   lambda b, ci, si: (b, ci, si)),
        ),
        compiler_params=pltpu.CompilerParams(
            # No reduction anywhere: every axis is independent, so let both
            # v7x TensorCores grab work even at B == 1.
            dimension_semantics=("parallel", "parallel", "parallel"),
        ),
        cost_estimate=pl.CostEstimate(
            flops=2 * B * C * HW,
            transcendentals=0,
            bytes_accessed=2 * B * C * HW * itemsize + 2 * B * C * 4,
        ),
    )(scale_p1, shift, img_flat)

    # TODO(synk): if the caller can donate `img`, add input_output_aliases to
    # reuse its HBM buffer for the output (footprint, not bandwidth, win).
    return out_flat.reshape(B, C, H, W)


if __name__ == "__main__":
    # Small shapes consistent with the module.
    B, C, H, W = 2, 4, 16, 16
    latent_dim = 8
    gain = 2 ** 0.5

    key = jax.random.PRNGKey(0)
    k_img, k_lat, k_w = jax.random.split(key, 3)

    img = jax.random.normal(k_img, (B, C, H, W), dtype=jnp.float32)
    latent = jax.random.normal(k_lat, (B, latent_dim), dtype=jnp.float32)

    # EqualizedLinearLayer params: weight ~ N(0,1) * he_scale, bias = 0.
    he_scaler = he_init_scale(latent_dim, gain)
    weight = jax.random.normal(k_w, (2 * C, latent_dim), dtype=jnp.float32) * he_scaler
    bias = jnp.zeros((2 * C,), dtype=jnp.float32)

    out = style_mod(img, latent, weight, bias)
    out = jax.block_until_ready(out)

    # Pure-JAX reference for sanity.
    style_ref = latent @ weight.T + bias                      # (B, 2C)
    style_ref = style_ref.reshape(B, 2, C, 1, 1)
    ref = img * (style_ref[:, 0] + 1.0) + style_ref[:, 1]
    assert jnp.allclose(out, ref, atol=1e-5, rtol=1e-5), "mismatch vs reference"

    print("KERNEL_OK")
</pallas_src>

<mosaic_0001>
module attributes {stable_mosaic.version = 11 : i64} {
  func.func @style_mod_kernel(%arg0: i32, %arg1: i32, %arg2: i32, %arg3: memref<1x4x1xf32, #tpu.memory_space<vmem>>, %arg4: memref<1x4x1xf32, #tpu.memory_space<vmem>>, %arg5: memref<1x4x256xf32, #tpu.memory_space<vmem>>, %arg6: memref<1x4x256xf32, #tpu.memory_space<vmem>>) attributes {dimension_semantics = [#tpu.dimension_semantics<parallel>, #tpu.dimension_semantics<parallel>, #tpu.dimension_semantics<parallel>], iteration_bounds = array<i64: 2, 1, 1>, scalar_prefetch = 0 : i64, scratch_operands = 0 : i64, tpu.core_type = #tpu.core_type<tc>, window_params = [{transform_indices = @transform_0, window_bounds = array<i64: 1, 4, 1>}, {transform_indices = @transform_1, window_bounds = array<i64: 1, 4, 1>}, {transform_indices = @transform_2, window_bounds = array<i64: 1, 4, 256>}, {transform_indices = @transform_3, window_bounds = array<i64: 1, 4, 256>}]} {
    %c0 = arith.constant 0 : index
    %c0_0 = arith.constant 0 : index
    %c0_1 = arith.constant 0 : index
    %0 = vector.load %arg5[%c0, %c0_0, %c0_1] : memref<1x4x256xf32, #tpu.memory_space<vmem>>, vector<1x4x256xf32>
    %c0_2 = arith.constant 0 : index
    %c0_3 = arith.constant 0 : index
    %c0_4 = arith.constant 0 : index
    %1 = vector.load %arg3[%c0_2, %c0_3, %c0_4] : memref<1x4x1xf32, #tpu.memory_space<vmem>>, vector<1x4x1xf32>
    %2 = vector.broadcast %1 : vector<1x4x1xf32> to vector<1x4x256xf32>
    %3 = arith.mulf %0, %2 : vector<1x4x256xf32>
    %c0_5 = arith.constant 0 : index
    %c0_6 = arith.constant 0 : index
    %c0_7 = arith.constant 0 : index
    %4 = vector.load %arg4[%c0_5, %c0_6, %c0_7] : memref<1x4x1xf32, #tpu.memory_space<vmem>>, vector<1x4x1xf32>
    %5 = vector.broadcast %4 : vector<1x4x1xf32> to vector<1x4x256xf32>
    %6 = arith.addf %3, %5 : vector<1x4x256xf32>
    %c0_8 = arith.constant 0 : index
    %c0_9 = arith.constant 0 : index
    %c0_10 = arith.constant 0 : index
    %7 = vector.load %arg6[%c0_8, %c0_9, %c0_10] : memref<1x4x256xf32, #tpu.memory_space<vmem>>, vector<1x4x256xf32>
    tpu.vector_store %arg6[%c0_8, %c0_9, %c0_10], %6 {strides = array<i32>} : memref<1x4x256xf32, #tpu.memory_space<vmem>>, vector<1x4x256xf32>,
    return
  }
  func.func @transform_0(%arg0: i32, %arg1: i32, %arg2: i32) -> (i32, i32, i32) {
    %c0_i32 = arith.constant 0 : i32
    %c0_i32_0 = arith.constant 0 : i32
    return %arg0, %arg1, %c0_i32 : i32, i32, i32
  }
  func.func @transform_1(%arg0: i32, %arg1: i32, %arg2: i32) -> (i32, i32, i32) {
    %c0_i32 = arith.constant 0 : i32
    %c0_i32_0 = arith.constant 0 : i32
    return %arg0, %arg1, %c0_i32 : i32, i32, i32
  }
  func.func @transform_2(%arg0: i32, %arg1: i32, %arg2: i32) -> (i32, i32, i32) {
    %c0_i32 = arith.constant 0 : i32
    return %arg0, %arg1, %arg2 : i32, i32, i32
  }
  func.func @transform_3(%arg0: i32, %arg1: i32, %arg2: i32) -> (i32, i32, i32) {
    %c0_i32 = arith.constant 0 : i32
    return %arg0, %arg1, %arg2 : i32, i32, i32
  }
}

</mosaic_0001>

<llo_original>
// kernel: tpu_custom_call.1
$region0: #{tpu_custom_call.1}
  #allocation0 [shape = 'u32[]', space=smem, size = 0x4, offset = 0x4, fixed_abs, tag = 'smem constant byte address 0x4 - core index']
  #allocation1 [shape = 'u32[144,128]{1,0:T(1,128)}', space=vmem, size = 0x12000, scoped, tag = 'internal scratch']
  %s0 = inlined_call_operand.vmem [shape: f32[2,4,1], index: 0, kind: input, shape index: {}]
  %s1 = inlined_call_operand.vmem [shape: f32[2,4,1], index: 1, kind: input, shape index: {}]
  %s2 = inlined_call_operand.vmem [shape: f32[2,4,256], index: 2, kind: input, shape index: {}]
  %s3 = inlined_call_operand.hbm [shape: f32[2,4,256], index: 3, kind: output, shape index: {}]
  %s4 = sld [smem:[#allocation0]]
  $region45: #{tpu_custom_call.1} parent=0
    _
  %s6 = ssub.s32 1, %s4
  %s7 = scalar_select 0, %s6, %s4
  $region1: #{tpu_custom_call.1} parent=0
    #allocation2 [shape = 'u8[8192]{0}', space=vmem, size = 0x2000, scoped, tag = 'output window, operand 0']
    #allocation3 [shape = 's32[2]{0}', space=sflag, size = 0x8, scoped, tag = 'scoped memory for tpu_custom_call.1']
    %8 = vsyncpa [#allocation3], 0
    %s9 = scalar_lea.sflag [#allocation3], 1
    %10 = vsyncpa %s9, 0
    loop: start=0, step=1, limit=4
    $region2: #{tpu_custom_call.1} parent=1 // loop_pre_header
      _
    $region3: #{tpu_custom_call.1} parent=1 // loop_header
      %s12 = sphi 0, %s16
      %p13 = scmp.ge.s32.totalorder %s12, 4
      %s19 = sphi 0, %s38
      %s20 = sphi 0, %s34
      %s21 = sphi 0, %s30
      %s22 = sphi 0, %s19
      %s23 = sphi 0, %s20
      %s24 = sphi 0, %s21
      %s25 = sphi 0, %s22
      %s26 = sphi 0, %s23
      %s27 = sphi 0, %s24
      %s43 = sphi 0, %s45
      %s46 = sphi 0, %s43
      %s47 = sphi 0, %s46
      %s63 = sphi 0, %s47
      %s71 = sphi 0, %s73
      %s74 = sphi 0, %s71
      %s75 = sphi 0, %s74
      %s91 = sphi 0, %s75
      %s101 = sphi 0, %s103
      %s104 = sphi 0, %s101
      %s105 = sphi 0, %s104
      %s121 = sphi 0, %s105
      %s131 = sphi 0, %s133
      %s134 = sphi 0, %s131
      %s135 = sphi 0, %s134
      %s151 = sphi 0, %s135
    $region4: #{tpu_custom_call.1} parent=1 // loop_header_branch
      %15 = sbr.rel (%p13) target = $region8
    $region5: #{tpu_custom_call.1} parent=1 // loop_body
      %s17 = ssub.s32 %s12, 1
      %s18 = ssub.s32 %s12, 2
      %s28 = sadd.s32 1, %s21
      %p29 = scmp.ge.s32.totalorder %s28, 1
      %s30 = scalar_select %p29, 0, %s28
      %s31 = sadd.s32 1, %s20
      %s32 = scalar_select %p29, %s31, %s20
      %p33 = scmp.ge.s32.totalorder %s32, 1
      %s34 = scalar_select %p33, 0, %s32
      %s35 = sadd.s32 1, %s19
      %s36 = scalar_select %p33, %s35, %s19
      %p37 = scmp.ge.s32.totalorder %s36, 2
      %s38 = scalar_select %p37, 0, %s36
      %s39 = ssub.s32 %s19, %s38
      %s40 = ssub.s32 %s20, %s34
      %s41 = sor.u32 %s39, %s40
      %p42 = scmp.eq.s32.totalorder %s41, 0
      %s44 = sadd.s32 %s43, 1
      %s45 = scalar_select %p42, %s43, %s44
      %p48 = pneg %p42
      %p49 = scmp.eq.s32.totalorder %s12, 1
      %p50 = por %p48, %p49
      %p51 = scmp.ne.s32.totalorder %s43, %s46
      %p52 = scmp.eq.s32.totalorder %s12, 0
      %p53 = por %p51, %p52
      %p54 = scmp.ne.s32.totalorder %s43, %s46
      %p55 = scmp.eq.s32.totalorder %s17, 1
      %p56 = por %p54, %p55
      %p57 = scmp.ne.s32.totalorder %s46, %s47
      %p58 = scmp.eq.s32.totalorder %s17, 0
      %p59 = por %p57, %p58
      %p60 = scmp.ne.s32.totalorder %s46, %s47
      %p61 = scmp.eq.s32.totalorder %s18, 1
      %p62 = por %p60, %p61
      %p64 = scmp.ne.s32.totalorder %s47, %s63
      %p65 = scmp.eq.s32.totalorder %s18, 0
      %p66 = por %p64, %p65
      %s67 = ssub.s32 %s19, %s38
      %s68 = ssub.s32 %s20, %s34
      %s69 = sor.u32 %s67, %s68
      %p70 = scmp.eq.s32.totalorder %s69, 0
      %s72 = sadd.s32 %s71, 1
      %s73 = scalar_select %p70, %s71, %s72
      %p76 = pneg %p70
      %p77 = scmp.eq.s32.totalorder %s12, 1
      %p78 = por %p76, %p77
      %p79 = scmp.ne.s32.totalorder %s71, %s74
      %p80 = scmp.eq.s32.totalorder %s12, 0
      %p81 = por %p79, %p80
      %p82 = scmp.ne.s32.totalorder %s71, %s74
      %p83 = scmp.eq.s32.totalorder %s17, 1
      %p84 = por %p82, %p83
      %p85 = scmp.ne.s32.totalorder %s74, %s75
      %p86 = scmp.eq.s32.totalorder %s17, 0
      %p87 = por %p85, %p86
      %p88 = scmp.ne.s32.totalorder %s74, %s75
      %p89 = scmp.eq.s32.totalorder %s18, 1
      %p90 = por %p88, %p89
      %p92 = scmp.ne.s32.totalorder %s75, %s91
      %p93 = scmp.eq.s32.totalorder %s18, 0
      %p94 = por %p92, %p93
      %s95 = ssub.s32 %s19, %s38
      %s96 = ssub.s32 %s20, %s34
      %s97 = sor.u32 %s95, %s96
      %s98 = ssub.s32 %s21, %s30
      %s99 = sor.u32 %s97, %s98
      %p100 = scmp.eq.s32.totalorder %s99, 0
      %s102 = sadd.s32 %s101, 1
      %s103 = scalar_select %p100, %s101, %s102
      %p106 = pneg %p100
      %p107 = scmp.eq.s32.totalorder %s12, 1
      %p108 = por %p106, %p107
      %p109 = scmp.ne.s32.totalorder %s101, %s104
      %p110 = scmp.eq.s32.totalorder %s12, 0
      %p111 = por %p109, %p110
      %p112 = scmp.ne.s32.totalorder %s101, %s104
      %p113 = scmp.eq.s32.totalorder %s17, 1
      %p114 = por %p112, %p113
      %p115 = scmp.ne.s32.totalorder %s104, %s105
      %p116 = scmp.eq.s32.totalorder %s17, 0
      %p117 = por %p115, %p116
      %p118 = scmp.ne.s32.totalorder %s104, %s105
      %p119 = scmp.eq.s32.totalorder %s18, 1
      %p120 = por %p118, %p119
      %p122 = scmp.ne.s32.totalorder %s105, %s121
      %p123 = scmp.eq.s32.totalorder %s18, 0
      %p124 = por %p122, %p123
      %s125 = ssub.s32 %s19, %s38
      %s126 = ssub.s32 %s20, %s34
      %s127 = sor.u32 %s125, %s126
      %s128 = ssub.s32 %s21, %s30
      %s129 = sor.u32 %s127, %s128
      %p130 = scmp.eq.s32.totalorder %s129, 0
      %s132 = sadd.s32 %s131, 1
      %s133 = scalar_select %p130, %s131, %s132
      %p136 = pneg %p130
      %p137 = scmp.eq.s32.totalorder %s12, 1
      %p138 = por %p136, %p137
      %p139 = scmp.ne.s32.totalorder %s131, %s134
      %p140 = scmp.eq.s32.totalorder %s12, 0
      %p141 = por %p139, %p140
      %p142 = scmp.ne.s32.totalorder %s131, %s134
      %p143 = scmp.eq.s32.totalorder %s17, 1
      %p144 = por %p142, %p143
      %p145 = scmp.ne.s32.totalorder %s134, %s135
      %p146 = scmp.eq.s32.totalorder %s17, 0
      %p147 = por %p145, %p146
      %p148 = scmp.ne.s32.totalorder %s134, %s135
      %p149 = scmp.eq.s32.totalorder %s18, 1
      %p150 = por %p148, %p149
      %p152 = scmp.ne.s32.totalorder %s135, %s151
      %p153 = scmp.eq.s32.totalorder %s18, 0
      %p154 = por %p152, %p153
      %p155 = scmp.le.s32.totalorder 1, %s12
      %p156 = scmp.lt.s32.totalorder %s12, 3
      %p157 = pnand %p155, %p156
      %p158 = pneg %p157
      // Predicated region
      $region9: #{tpu_custom_call.1} parent=5 // pred_check
        _
      $region10: #{tpu_custom_call.1} parent=5 // pred_check_branch
        %160 = sbr.rel (%p157) target = $region12
      $region11: #{tpu_custom_call.1} parent=5 // pred_region
        %s161 = ssub.s32 %s12, 1
      $region12: #{tpu_custom_call.1} parent=5 // pred_fallthru
        _
      %p162 = scmp.lt.s32.totalorder %s12, 2
      // Predicated region
      $region13: #{tpu_custom_call.1} parent=5 // pred_check
        %p163 = pneg %p162
      $region14: #{tpu_custom_call.1} parent=5 // pred_check_branch
        %165 = sbr.rel (%p163) target = $region16
      $region15: #{tpu_custom_call.1} parent=5 // pred_region
        // Predicated region
        $region17: #{tpu_custom_call.1} parent=15 // pred_check
          %p166 = pneg %p53
        $region18: #{tpu_custom_call.1} parent=15 // pred_check_branch
          %168 = sbr.rel (%p166) target = $region20
        $region19: #{tpu_custom_call.1} parent=15 // pred_region
          %p169 = scmp.lt.s32.totalorder %s19, 1
          %s170 = scalar_select %p169, %s19, 1
          %p171 = scmp.lt.s32.totalorder %s20, 0
          %s172 = scalar_select %p171, %s20, 0
          %s173 = sadd.s32 %s172, %s170
          %s174 = smul.addr %s173, 4
          %s175 = scalar_lea.vmem %s0, %s174
        $region20: #{tpu_custom_call.1} parent=15 // pred_fallthru
          _
        // Predicated region
        $region21: #{tpu_custom_call.1} parent=15 // pred_check
          %p176 = pneg %p81
        $region22: #{tpu_custom_call.1} parent=15 // pred_check_branch
          %178 = sbr.rel (%p176) target = $region24
        $region23: #{tpu_custom_call.1} parent=15 // pred_region
          %p179 = scmp.lt.s32.totalorder %s19, 1
          %s180 = scalar_select %p179, %s19, 1
          %p181 = scmp.lt.s32.totalorder %s20, 0
          %s182 = scalar_select %p181, %s20, 0
          %s183 = sadd.s32 %s182, %s180
          %s184 = smul.addr %s183, 4
          %s185 = scalar_lea.vmem %s1, %s184
        $region24: #{tpu_custom_call.1} parent=15 // pred_fallthru
          _
        // Predicated region
        $region25: #{tpu_custom_call.1} parent=15 // pred_check
          %p186 = pneg %p111
        $region26: #{tpu_custom_call.1} parent=15 // pred_check_branch
          %188 = sbr.rel (%p186) target = $region28
        $region27: #{tpu_custom_call.1} parent=15 // pred_region
          %s189 = smul.u32 2, %s21
          %p190 = scmp.lt.s32.totalorder %s19, 1
          %s191 = scalar_select %p190, %s19, 1
          %p192 = scmp.lt.s32.totalorder %s20, 0
          %s193 = scalar_select %p192, %s20, 0
          %p194 = scmp.lt.s32.totalorder %s189, 1
          %s195 = scalar_select %p194, %s189, 1
          %s196 = smul.addr %s193, 2
          %s197 = sadd.s32 %s195, %s196
          %s198 = smul.addr %s191, 2
          %s199 = sadd.s32 %s197, %s198
          %s200 = smul.addr %s199, 4
          %s201 = scalar_lea.vmem %s2, %s200
          %s202 = smul.u32 2, %s21
        $region28: #{tpu_custom_call.1} parent=15 // pred_fallthru
          _
      $region16: #{tpu_custom_call.1} parent=5 // pred_fallthru
        _
      %p203 = scmp.le.s32.totalorder 1, %s12
      %p204 = scmp.lt.s32.totalorder %s12, 3
      %p205 = pnand %p203, %p204
      %p206 = pneg %p205
      // Predicated region
      $region29: #{tpu_custom_call.1} parent=5 // pred_check
        _
      $region30: #{tpu_custom_call.1} parent=5 // pred_check_branch
        %208 = sbr.rel (%p205) target = $region32
      $region31: #{tpu_custom_call.1} parent=5 // pred_region
        %s209 = ssub.s32 %s12, 1
        %p210 = scmp.lt.s32.totalorder %s22, 1
        %s211 = scalar_select %p210, %s22, 1
        %p212 = scmp.lt.s32.totalorder %s23, 0
        %s213 = scalar_select %p212, %s23, 0
        %s214 = sadd.s32 %s213, %s211
        %s215 = smul.addr %s214, 4
        %s216 = scalar_lea.vmem %s0, %s215
        %p217 = pneg %p59
        %p218 = pneg %p56
        %p219 = scmp.lt.s32.totalorder %s22, 1
        %s220 = scalar_select %p219, %s22, 1
        %p221 = scmp.lt.s32.totalorder %s23, 0
        %s222 = scalar_select %p221, %s23, 0
        %s223 = sadd.s32 %s222, %s220
        %s224 = smul.addr %s223, 4
        %s225 = scalar_lea.vmem %s1, %s224
        %p226 = pneg %p87
        %p227 = pneg %p84
        %s228 = smul.u32 2, %s24
        %p229 = scmp.lt.s32.totalorder %s22, 1
        %s230 = scalar_select %p229, %s22, 1
        %p231 = scmp.lt.s32.totalorder %s23, 0
        %s232 = scalar_select %p231, %s23, 0
        %p233 = scmp.lt.s32.totalorder %s228, 1
        %s234 = scalar_select %p233, %s228, 1
        %s235 = smul.addr %s232, 2
        %s236 = sadd.s32 %s234, %s235
        %s237 = smul.addr %s230, 2
        %s238 = sadd.s32 %s236, %s237
        %s239 = smul.addr %s238, 4
        %s240 = scalar_lea.vmem %s2, %s239
        %p241 = pneg %p117
        %p242 = pneg %p114
        %p243 = pneg %p147
        %p244 = pneg %p144
        %s245 = sand.u32 %s134, 1
        %s246 = scalar_lea.sflag [#allocation3], %s245
        %s247 = sand.u32 %s134, 1
        %s248 = smul.addr %s247, 8
        %s249 = scalar_lea.vmem [#allocation2], %s248
        %p250 = scmp.lt.s32.totalorder %s22, 1
        %s251 = scalar_select %p250, %s22, 1
        %p252 = scmp.lt.s32.totalorder %s23, 0
        %s253 = scalar_select %p252, %s23, 0
        %s254 = sadd.s32 %s253, %s251
        %s255 = smul.addr %s254, 4
        %s256 = scalar_lea.vmem %s0, %s255
        %p257 = scmp.lt.s32.totalorder %s22, 1
        %s258 = scalar_select %p257, %s22, 1
        %p259 = scmp.lt.s32.totalorder %s23, 0
        %s260 = scalar_select %p259, %s23, 0
        %s261 = sadd.s32 %s260, %s258
        %s262 = smul.addr %s261, 4
        %s263 = scalar_lea.vmem %s1, %s262
        %s264 = smul.u32 2, %s24
        %p265 = scmp.lt.s32.totalorder %s22, 1
        %s266 = scalar_select %p265, %s22, 1
        %p267 = scmp.lt.s32.totalorder %s23, 0
        %s268 = scalar_select %p267, %s23, 0
        %p269 = scmp.lt.s32.totalorder %s264, 1
        %s270 = scalar_select %p269, %s264, 1
        %s271 = smul.addr %s268, 2
        %s272 = sadd.s32 %s270, %s271
        %s273 = smul.addr %s266, 2
        %s274 = sadd.s32 %s272, %s273
        %s275 = smul.addr %s274, 4
        %s276 = scalar_lea.vmem %s2, %s275
        %s277 = smul.u32 2, %s24
        %s278 = smul.u32 2, %s24
        %v279 = vld [vmem:[%s276] sm:$0xff]
        %v280 = vld [vmem:[%s256] sm:$0xf]
        %282 = vset.pattern.permute.xlu0 0
        %283 = vperm.xlu0 %282, %v280
        %v284 = vpop.permute.xlu0 %283
        %v286 = vunpack.c.l.s4 839922192
        %v287 = vunpack.c.0.s8 %v286
        %v288 = vlaneseq
        %v289 = vshrl.u32 %v288, 7
        %v290 = vsub.s32 %v287, %v289
        %v291 = vrot.slane %v284, %v290
        %v293 = vmul.f32 %v279, %v291
        %v294 = vld [vmem:[%s263] sm:$0xf]
        %296 = vset.pattern.permute.xlu0 0
        %297 = vperm.xlu0 %296, %v294
        %v298 = vpop.permute.xlu0 %297
        %v300 = vunpack.c.l.s4 839922192
        %v301 = vunpack.c.0.s8 %v300
        %v302 = vlaneseq
        %v303 = vshrl.u32 %v302, 7
        %v304 = vsub.s32 %v301, %v303
        %v305 = vrot.slane %v298, %v304
        %v307 = vadd.f32 %v293, %v305
        %308 = vst [vmem:[%s249] sm:$0xff] %v307
        %s309 = sand.u32 %s134, 1
        %s310 = scalar_lea.sflag [#allocation3], %s309
        %s311 = sand.u32 %s134, 1
        %s312 = smul.addr %s311, 8
        %s313 = scalar_lea.vmem [#allocation2], %s312
        // Predicated region
        $region33: #{tpu_custom_call.1} parent=31 // pred_check
          %p314 = pneg %p144
        $region34: #{tpu_custom_call.1} parent=31 // pred_check_branch
          %316 = sbr.rel (%p314) target = $region36
        $region35: #{tpu_custom_call.1} parent=31 // pred_region
          %s317 = smul.u32 2, %s24
          %s319 = ssub.s32 128, 128
          %320 = vsyncadd %s310, %s319
          %s321 = smul.addr %s23, 2
          %s322 = sadd.s32 %s317, %s321
          %s323 = smul.addr %s22, 2
          %s324 = sadd.s32 %s322, %s323
          %s325 = smul.addr %s324, 64
          %s326 = scalar_lea.hbm %s3, %s325
          %s328 = sshll.u32 %s313, 4
          %s329 = int_to_ptr.vmem [resolvable:$true] %s328
          %331 = dma.vmem_to_hbm [thread:$0]  %s329, 128, %s326, %s310
        $region36: #{tpu_custom_call.1} parent=31 // pred_fallthru
          _
      $region32: #{tpu_custom_call.1} parent=5 // pred_fallthru
        _
      %p332 = scmp.le.s32.totalorder 2, %s12
      // Predicated region
      $region37: #{tpu_custom_call.1} parent=5 // pred_check
        %p333 = pneg %p332
      $region38: #{tpu_custom_call.1} parent=5 // pred_check_branch
        %335 = sbr.rel (%p333) target = $region40
      $region39: #{tpu_custom_call.1} parent=5 // pred_region
        %s336 = ssub.s32 %s12, 2
        // Predicated region
        $region41: #{tpu_custom_call.1} parent=39 // pred_check
          %p337 = pneg %p150
        $region42: #{tpu_custom_call.1} parent=39 // pred_check_branch
          %339 = sbr.rel (%p337) target = $region44
        $region43: #{tpu_custom_call.1} parent=39 // pred_region
          %s340 = sand.u32 %s135, 1
          %s341 = scalar_lea.sflag [#allocation3], %s340
          %s342 = sand.u32 %s135, 1
          %s343 = smul.addr %s342, 8
          %s344 = scalar_lea.vmem [#allocation2], %s343
          %345 = dma.done %s341, 128
        $region44: #{tpu_custom_call.1} parent=39 // pred_fallthru
          _
      $region40: #{tpu_custom_call.1} parent=5 // pred_fallthru
        _
    $region6: #{tpu_custom_call.1} parent=1 // loop_footer
      %s16 = sadd.s32 1, %s12
    $region7: #{tpu_custom_call.1} parent=1 // loop_footer_branch
      %11 = sbr.rel target = $region3
    $region8: #{tpu_custom_call.1} parent=1 // loop_exit
      _
    %346 = vsyncpa [#allocation3], 1
    %s347 = scalar_lea.sflag [#allocation3], 1
    %348 = vsyncpa %s347, 1

</llo_original>
